<compile_context>
chip_gen: v6e
topology: v6e:2x2x1
jax: 0.10.0
libtpu: 0.0.40
codegen_flags: <defaults>
</compile_context>

<pallas_src>
import jax
import jax.numpy as jnp
import numpy as np
from jax import lax
from jax.experimental import pallas as pl
from jax.experimental.pallas import tpu as pltpu

_LANE = 128
_MAX_TR = 512  # 512 rows * 128 lanes/step; blocks ~3.8 MiB, 2x-buffered ~7.5 MiB


def _pose_kernel(pos_ref, out_ref):
    # pos_ref : VMEM (3, TR, 128)  f32 -- one position per lane, dense tiles
    # out_ref : VMEM (12, TR, 128) f32 -- top 3x4 of the row-major pose / lane
    p0 = pos_ref[0]
    p1 = pos_ref[1]
    p2 = pos_ref[2]

    # z_axis = -position / ||position||   (rsqrt + muls instead of sqrt + divs)
    inv_norm = lax.rsqrt(p0 * p0 + p1 * p1 + p2 * p2)
    z0 = -p0 * inv_norm
    z1 = -p1 * inv_norm
    z2 = -p2 * inv_norm

    # branch: if z0 == 0 and z1 == 0 -> y = -[1,0,0]
    #         else                   -> y = -cross(z, [0,0,1]) = (-z1, z0, 0)
    # Testing the raw position components is equivalent and rounding-robust.
    degenerate = jnp.logical_and(p0 == 0.0, p1 == 0.0)
    y0 = jnp.where(degenerate, jnp.float32(-1.0), -z1)
    y1 = jnp.where(degenerate, jnp.float32(0.0), z0)
    # y2 is statically zero on both branches -> dropped from the norm / cross.

    inv_ynorm = lax.rsqrt(y0 * y0 + y1 * y1)
    y0 = y0 * inv_ynorm
    y1 = y1 * inv_ynorm

    # x_axis = cross(y_axis, z_axis) with y2 == 0
    x0 = y1 * z2
    x1 = -y0 * z2
    x2 = y0 * z1 - y1 * z0

    # Row-major flat(3,4) layout per lane: row r -> planes [4r:4r+4] =
    # (x_r, y_r, z_r, p_r).  Per-plane stores: full dense vst's, no concat.
    out_ref[0] = x0
    out_ref[1] = y0
    out_ref[2] = z0
    out_ref[3] = p0
    out_ref[4] = x1
    out_ref[5] = y1
    out_ref[6] = z1
    out_ref[7] = p1
    out_ref[8] = x2
    out_ref[9] = jnp.zeros_like(p0)   # y2 == 0
    out_ref[10] = z2
    out_ref[11] = p2


def view_poses(positions: jax.Array) -> jax.Array:
    """Batched position2heading_pose: (N, 3) positions -> (N, 4, 4) poses."""
    positions = jnp.asarray(positions, jnp.float32).reshape(-1, 3)
    n = positions.shape[0]

    rows_needed = pl.cdiv(n, _LANE)                 # 128-lane rows of poses
    tr = min(_MAX_TR, pl.cdiv(rows_needed, 8) * 8)  # block rows, multiple of 8
    r_pad = pl.cdiv(rows_needed, tr) * tr
    n_pad = r_pad * _LANE

    # Lane-dense input slab (3, r_pad, 128): one pose per lane, component per
    # plane.  Padding lanes use the benign position (0, 0, 1) -> no inf/NaN.
    pos_t = jnp.zeros((3, n_pad), jnp.float32).at[2, :].set(1.0)
    pos_t = pos_t.at[:, :n].set(positions.T)
    pos_slab = pos_t.reshape(3, r_pad, _LANE)

    flat12 = pl.pallas_call(
        _pose_kernel,
        out_shape=jax.ShapeDtypeStruct((12, r_pad, _LANE), jnp.float32),
        grid=(r_pad // tr,),
        in_specs=[pl.BlockSpec((3, tr, _LANE), lambda i: (0, i, 0))],
        out_specs=pl.BlockSpec((12, tr, _LANE), lambda i: (0, i, 0)),
        compiler_params=pltpu.CompilerParams(
            dimension_semantics=("parallel",),   # shards across TCs on v7x
            vmem_limit_bytes=32 << 20,           # plenty; safe on all chips
        ),
    )(pos_slab)

    # (12, r_pad, 128) -> (N, 3, 4); append constant bottom row in the wrapper.
    top = flat12.reshape(12, n_pad)[:, :n].T.reshape(n, 3, 4)
    bottom = jnp.broadcast_to(
        jnp.array([[[0.0, 0.0, 0.0, 1.0]]], jnp.float32), (n, 1, 4)
    )
    return jnp.concatenate([top, bottom], axis=1)


def view_pose_forward(init_view: jax.Array, pt: jax.Array) -> jax.Array:
    """Pallas equivalent of ViewPose.forward(): returns a (4, 4) f32 pose."""
    # Fuse the parameter add in the wrapper: one (3,) position into the kernel.
    position = (init_view.reshape(3).astype(jnp.float32)
                + pt.reshape(3).astype(jnp.float32))
    return view_poses(position[None, :])[0]


def _reference(position):
    """NumPy reference of position2heading_pose for validation."""
    position = np.asarray(position, np.float32)
    z = -position / np.linalg.norm(position)
    if z[0] == 0 and z[1] == 0:
        y = -np.array([1.0, 0.0, 0.0], np.float32)
    else:
        y = -np.cross(z, np.array([0.0, 0.0, 1.0], np.float32))
    y = y / np.linalg.norm(y)
    x = np.cross(y, z)
    pose = np.zeros((4, 4), np.float32)
    pose[:3, 3] = position
    pose[:3, 2] = z
    pose[:3, 1] = y
    pose[:3, 0] = x
    pose[3, 3] = 1.0
    return pose


if __name__ == "__main__":
    key = jax.random.PRNGKey(0)
    k_init, k_batch = jax.random.split(key)

    # --- single-pose forward, exactly like the nn.Module ---------------------
    init_c2w = jax.random.normal(k_init, (3,), dtype=jnp.float32)
    pt = jnp.zeros((3,), dtype=jnp.float32)  # nn.Parameter init value

    pose = jax.block_until_ready(view_pose_forward(init_c2w, pt))
    ref = _reference(np.asarray(init_c2w) + np.asarray(pt))
    np.testing.assert_allclose(np.asarray(pose), ref, rtol=1e-5, atol=1e-5)

    # --- small batched call (amortizes dispatch; exercises the z-axis branch) -
    rand_pos = jax.random.normal(k_batch, (7, 3), dtype=jnp.float32)
    z_aligned = jnp.array([[0.0, 0.0, 2.5]], dtype=jnp.float32)
    batch_pos = jnp.concatenate([rand_pos, z_aligned], axis=0)  # (8, 3)

    poses = jax.block_until_ready(view_poses(batch_pos))
    batch_np = np.asarray(batch_pos)
    for i in range(batch_np.shape[0]):
        np.testing.assert_allclose(
            np.asarray(poses[i]), _reference(batch_np[i]), rtol=1e-5, atol=1e-5
        )

    print("KERNEL_OK")
</pallas_src>

<mosaic_0001>
module attributes {stable_mosaic.version = 11 : i64} {
  func.func @_pose_kernel(%arg0: i32, %arg1: memref<3x8x128xf32, #tpu.memory_space<vmem>>, %arg2: memref<12x8x128xf32, #tpu.memory_space<vmem>>) attributes {dimension_semantics = [#tpu.dimension_semantics<parallel>], iteration_bounds = array<i64: 1>, scalar_prefetch = 0 : i64, scratch_operands = 0 : i64, tpu.core_type = #tpu.core_type<tc>, window_params = [{transform_indices = @transform_0, window_bounds = array<i64: 3, 8, 128>}, {transform_indices = @transform_1, window_bounds = array<i64: 12, 8, 128>}]} {
    %c0 = arith.constant 0 : index
    %c0_0 = arith.constant 0 : index
    %c0_1 = arith.constant 0 : index
    %0 = vector.load %arg1[%c0, %c0_0, %c0_1] : memref<3x8x128xf32, #tpu.memory_space<vmem>>, vector<1x8x128xf32>
    %1 = vector.shape_cast %0 : vector<1x8x128xf32> to vector<8x128xf32>
    %c1 = arith.constant 1 : index
    %c0_2 = arith.constant 0 : index
    %c0_3 = arith.constant 0 : index
    %2 = vector.load %arg1[%c1, %c0_2, %c0_3] : memref<3x8x128xf32, #tpu.memory_space<vmem>>, vector<1x8x128xf32>
    %3 = vector.shape_cast %2 : vector<1x8x128xf32> to vector<8x128xf32>
    %c2 = arith.constant 2 : index
    %c0_4 = arith.constant 0 : index
    %c0_5 = arith.constant 0 : index
    %4 = vector.load %arg1[%c2, %c0_4, %c0_5] : memref<3x8x128xf32, #tpu.memory_space<vmem>>, vector<1x8x128xf32>
    %5 = vector.shape_cast %4 : vector<1x8x128xf32> to vector<8x128xf32>
    %6 = arith.mulf %1, %1 : vector<8x128xf32>
    %7 = arith.mulf %3, %3 : vector<8x128xf32>
    %8 = arith.addf %6, %7 : vector<8x128xf32>
    %9 = arith.mulf %5, %5 : vector<8x128xf32>
    %10 = arith.addf %8, %9 : vector<8x128xf32>
    %11 = math.rsqrt %10 : vector<8x128xf32>
    %cst = arith.constant 0.000000e+00 : f32
    %12 = vector.broadcast %cst : f32 to vector<8x128xf32>
    %13 = arith.subf %12, %1 : vector<8x128xf32>
    %14 = arith.mulf %13, %11 : vector<8x128xf32>
    %cst_6 = arith.constant 0.000000e+00 : f32
    %15 = vector.broadcast %cst_6 : f32 to vector<8x128xf32>
    %16 = arith.subf %15, %3 : vector<8x128xf32>
    %17 = arith.mulf %16, %11 : vector<8x128xf32>
    %cst_7 = arith.constant 0.000000e+00 : f32
    %18 = vector.broadcast %cst_7 : f32 to vector<8x128xf32>
    %19 = arith.subf %18, %5 : vector<8x128xf32>
    %20 = arith.mulf %19, %11 : vector<8x128xf32>
    %cst_8 = arith.constant 0.000000e+00 : f32
    %21 = vector.broadcast %cst_8 : f32 to vector<8x128xf32>
    %22 = arith.cmpf oeq, %1, %21 : vector<8x128xf32>
    %cst_9 = arith.constant 0.000000e+00 : f32
    %23 = vector.broadcast %cst_9 : f32 to vector<8x128xf32>
    %24 = arith.cmpf oeq, %3, %23 : vector<8x128xf32>
    %25 = arith.andi %22, %24 : vector<8x128xi1>
    %cst_10 = arith.constant 0.000000e+00 : f32
    %26 = vector.broadcast %cst_10 : f32 to vector<8x128xf32>
    %27 = arith.subf %26, %17 : vector<8x128xf32>
    %cst_11 = arith.constant -1.000000e+00 : f32
    %28 = vector.broadcast %cst_11 : f32 to vector<8x128xf32>
    %29 = arith.select %25, %28, %27 : vector<8x128xi1>, vector<8x128xf32>
    %cst_12 = arith.constant 0.000000e+00 : f32
    %30 = vector.broadcast %cst_12 : f32 to vector<8x128xf32>
    %31 = arith.select %25, %30, %14 : vector<8x128xi1>, vector<8x128xf32>
    %32 = arith.mulf %29, %29 : vector<8x128xf32>
    %33 = arith.mulf %31, %31 : vector<8x128xf32>
    %34 = arith.addf %32, %33 : vector<8x128xf32>
    %35 = math.rsqrt %34 : vector<8x128xf32>
    %36 = arith.mulf %29, %35 : vector<8x128xf32>
    %37 = arith.mulf %31, %35 : vector<8x128xf32>
    %38 = arith.mulf %37, %20 : vector<8x128xf32>
    %cst_13 = arith.constant 0.000000e+00 : f32
    %39 = vector.broadcast %cst_13 : f32 to vector<8x128xf32>
    %40 = arith.subf %39, %36 : vector<8x128xf32>
    %41 = arith.mulf %40, %20 : vector<8x128xf32>
    %42 = arith.mulf %36, %17 : vector<8x128xf32>
    %43 = arith.mulf %37, %14 : vector<8x128xf32>
    %44 = arith.subf %42, %43 : vector<8x128xf32>
    %c0_14 = arith.constant 0 : index
    %c0_15 = arith.constant 0 : index
    %c0_16 = arith.constant 0 : index
    %45 = vector.load %arg2[%c0_14, %c0_15, %c0_16] : memref<12x8x128xf32, #tpu.memory_space<vmem>>, vector<1x8x128xf32>
    %46 = vector.shape_cast %45 : vector<1x8x128xf32> to vector<8x128xf32>
    %47 = vector.shape_cast %38 : vector<8x128xf32> to vector<1x8x128xf32>
    tpu.vector_store %arg2[%c0_14, %c0_15, %c0_16], %47 {strides = array<i32>} : memref<12x8x128xf32, #tpu.memory_space<vmem>>, vector<1x8x128xf32>,
    %c1_17 = arith.constant 1 : index
    %c0_18 = arith.constant 0 : index
    %c0_19 = arith.constant 0 : index
    %48 = vector.load %arg2[%c1_17, %c0_18, %c0_19] : memref<12x8x128xf32, #tpu.memory_space<vmem>>, vector<1x8x128xf32>
    %49 = vector.shape_cast %48 : vector<1x8x128xf32> to vector<8x128xf32>
    %50 = vector.shape_cast %36 : vector<8x128xf32> to vector<1x8x128xf32>
    tpu.vector_store %arg2[%c1_17, %c0_18, %c0_19], %50 {strides = array<i32>} : memref<12x8x128xf32, #tpu.memory_space<vmem>>, vector<1x8x128xf32>,
    %c2_20 = arith.constant 2 : index
    %c0_21 = arith.constant 0 : index
    %c0_22 = arith.constant 0 : index
    %51 = vector.load %arg2[%c2_20, %c0_21, %c0_22] : memref<12x8x128xf32, #tpu.memory_space<vmem>>, vector<1x8x128xf32>
    %52 = vector.shape_cast %51 : vector<1x8x128xf32> to vector<8x128xf32>
    %53 = vector.shape_cast %14 : vector<8x128xf32> to vector<1x8x128xf32>
    tpu.vector_store %arg2[%c2_20, %c0_21, %c0_22], %53 {strides = array<i32>} : memref<12x8x128xf32, #tpu.memory_space<vmem>>, vector<1x8x128xf32>,
    %c3 = arith.constant 3 : index
    %c0_23 = arith.constant 0 : index
    %c0_24 = arith.constant 0 : index
    %54 = vector.load %arg2[%c3, %c0_23, %c0_24] : memref<12x8x128xf32, #tpu.memory_space<vmem>>, vector<1x8x128xf32>
    %55 = vector.shape_cast %54 : vector<1x8x128xf32> to vector<8x128xf32>
    %56 = vector.shape_cast %1 : vector<8x128xf32> to vector<1x8x128xf32>
    tpu.vector_store %arg2[%c3, %c0_23, %c0_24], %56 {strides = array<i32>} : memref<12x8x128xf32, #tpu.memory_space<vmem>>, vector<1x8x128xf32>,
    %c4 = arith.constant 4 : index
    %c0_25 = arith.constant 0 : index
    %c0_26 = arith.constant 0 : index
    %57 = vector.load %arg2[%c4, %c0_25, %c0_26] : memref<12x8x128xf32, #tpu.memory_space<vmem>>, vector<1x8x128xf32>
    %58 = vector.shape_cast %57 : vector<1x8x128xf32> to vector<8x128xf32>
    %59 = vector.shape_cast %41 : vector<8x128xf32> to vector<1x8x128xf32>
    tpu.vector_store %arg2[%c4, %c0_25, %c0_26], %59 {strides = array<i32>} : memref<12x8x128xf32, #tpu.memory_space<vmem>>, vector<1x8x128xf32>,
    %c5 = arith.constant 5 : index
    %c0_27 = arith.constant 0 : index
    %c0_28 = arith.constant 0 : index
    %60 = vector.load %arg2[%c5, %c0_27, %c0_28] : memref<12x8x128xf32, #tpu.memory_space<vmem>>, vector<1x8x128xf32>
    %61 = vector.shape_cast %60 : vector<1x8x128xf32> to vector<8x128xf32>
    %62 = vector.shape_cast %37 : vector<8x128xf32> to vector<1x8x128xf32>
    tpu.vector_store %arg2[%c5, %c0_27, %c0_28], %62 {strides = array<i32>} : memref<12x8x128xf32, #tpu.memory_space<vmem>>, vector<1x8x128xf32>,
    %c6 = arith.constant 6 : index
    %c0_29 = arith.constant 0 : index
    %c0_30 = arith.constant 0 : index
    %63 = vector.load %arg2[%c6, %c0_29, %c0_30] : memref<12x8x128xf32, #tpu.memory_space<vmem>>, vector<1x8x128xf32>
    %64 = vector.shape_cast %63 : vector<1x8x128xf32> to vector<8x128xf32>
    %65 = vector.shape_cast %17 : vector<8x128xf32> to vector<1x8x128xf32>
    tpu.vector_store %arg2[%c6, %c0_29, %c0_30], %65 {strides = array<i32>} : memref<12x8x128xf32, #tpu.memory_space<vmem>>, vector<1x8x128xf32>,
    %c7 = arith.constant 7 : index
    %c0_31 = arith.constant 0 : index
    %c0_32 = arith.constant 0 : index
    %66 = vector.load %arg2[%c7, %c0_31, %c0_32] : memref<12x8x128xf32, #tpu.memory_space<vmem>>, vector<1x8x128xf32>
    %67 = vector.shape_cast %66 : vector<1x8x128xf32> to vector<8x128xf32>
    %68 = vector.shape_cast %3 : vector<8x128xf32> to vector<1x8x128xf32>
    tpu.vector_store %arg2[%c7, %c0_31, %c0_32], %68 {strides = array<i32>} : memref<12x8x128xf32, #tpu.memory_space<vmem>>, vector<1x8x128xf32>,
    %c8 = arith.constant 8 : index
    %c0_33 = arith.constant 0 : index
    %c0_34 = arith.constant 0 : index
    %69 = vector.load %arg2[%c8, %c0_33, %c0_34] : memref<12x8x128xf32, #tpu.memory_space<vmem>>, vector<1x8x128xf32>
    %70 = vector.shape_cast %69 : vector<1x8x128xf32> to vector<8x128xf32>
    %71 = vector.shape_cast %44 : vector<8x128xf32> to vector<1x8x128xf32>
    tpu.vector_store %arg2[%c8, %c0_33, %c0_34], %71 {strides = array<i32>} : memref<12x8x128xf32, #tpu.memory_space<vmem>>, vector<1x8x128xf32>,
    %cst_35 = arith.constant 0.000000e+00 : f32
    %72 = vector.broadcast %cst_35 : f32 to vector<8x128xf32>
    %c9 = arith.constant 9 : index
    %c0_36 = arith.constant 0 : index
    %c0_37 = arith.constant 0 : index
    %73 = vector.load %arg2[%c9, %c0_36, %c0_37] : memref<12x8x128xf32, #tpu.memory_space<vmem>>, vector<1x8x128xf32>
    %74 = vector.shape_cast %73 : vector<1x8x128xf32> to vector<8x128xf32>
    %75 = vector.shape_cast %72 : vector<8x128xf32> to vector<1x8x128xf32>
    tpu.vector_store %arg2[%c9, %c0_36, %c0_37], %75 {strides = array<i32>} : memref<12x8x128xf32, #tpu.memory_space<vmem>>, vector<1x8x128xf32>,
    %c10 = arith.constant 10 : index
    %c0_38 = arith.constant 0 : index
    %c0_39 = arith.constant 0 : index
    %76 = vector.load %arg2[%c10, %c0_38, %c0_39] : memref<12x8x128xf32, #tpu.memory_space<vmem>>, vector<1x8x128xf32>
    %77 = vector.shape_cast %76 : vector<1x8x128xf32> to vector<8x128xf32>
    %78 = vector.shape_cast %20 : vector<8x128xf32> to vector<1x8x128xf32>
    tpu.vector_store %arg2[%c10, %c0_38, %c0_39], %78 {strides = array<i32>} : memref<12x8x128xf32, #tpu.memory_space<vmem>>, vector<1x8x128xf32>,
    %c11 = arith.constant 11 : index
    %c0_40 = arith.constant 0 : index
    %c0_41 = arith.constant 0 : index
    %79 = vector.load %arg2[%c11, %c0_40, %c0_41] : memref<12x8x128xf32, #tpu.memory_space<vmem>>, vector<1x8x128xf32>
    %80 = vector.shape_cast %79 : vector<1x8x128xf32> to vector<8x128xf32>
    %81 = vector.shape_cast %5 : vector<8x128xf32> to vector<1x8x128xf32>
    tpu.vector_store %arg2[%c11, %c0_40, %c0_41], %81 {strides = array<i32>} : memref<12x8x128xf32, #tpu.memory_space<vmem>>, vector<1x8x128xf32>,
    return
  }
  func.func @transform_0(%arg0: i32) -> (i32, i32, i32) {
    %c0_i32 = arith.constant 0 : i32
    %c0_i32_0 = arith.constant 0 : i32
    %c0_i32_1 = arith.constant 0 : i32
    return %c0_i32, %arg0, %c0_i32_0 : i32, i32, i32
  }
  func.func @transform_1(%arg0: i32) -> (i32, i32, i32) {
    %c0_i32 = arith.constant 0 : i32
    %c0_i32_0 = arith.constant 0 : i32
    %c0_i32_1 = arith.constant 0 : i32
    return %c0_i32, %arg0, %c0_i32_0 : i32, i32, i32
  }
}

</mosaic_0001>

<llo_original>
// kernel: tpu_custom_call.1
$region0: #{tpu_custom_call.1}
  #allocation0 [shape = 'u32[]', space=smem, size = 0x4, offset = 0x4, fixed_abs, tag = 'smem constant byte address 0x4 - core index']
  #allocation1 [shape = 'u32[144,128]{1,0:T(1,128)}', space=vmem, size = 0x12000, scoped, tag = 'internal scratch']
  %s0 = inlined_call_operand.hbm [shape: f32[3,8,128], index: 0, kind: input, shape index: {}]
  %s1 = inlined_call_operand.hbm [shape: f32[12,8,128], index: 1, kind: output, shape index: {}]
  %s2 = sld [smem:[#allocation0]]
  $region18: #{tpu_custom_call.1} parent=0
    _
  %s4 = ssub.s32 1, %s2
  %s5 = scalar_select 0, %s4, %s2
  $region1: #{tpu_custom_call.1} parent=0
    #allocation2 [shape = 'u8[12288]{0}', space=vmem, size = 0x3000, scoped, tag = 'input window, operand 0, single buffered']
    #allocation3 [shape = 's32[1]{0}', space=sflag, size = 0x4, scoped, tag = 'scoped memory for tpu_custom_call.1']
    #allocation4 [shape = 's32[1]{0}', space=sflag, size = 0x4, scoped, tag = 'scoped memory for tpu_custom_call.1']
    #allocation5 [shape = 'u8[49152]{0}', space=vmem, size = 0xc000, scoped, tag = 'output window, operand 0, single buffered']
    %6 = vsyncpa [#allocation3], 0
    %7 = vsyncpa [#allocation4], 0
    // Predicated region
    $region2: #{tpu_custom_call.1} parent=1 // pred_check
      _
    $region3: #{tpu_custom_call.1} parent=1 // pred_check_branch
      %9 = sbr.rel (0) target = $region5
    $region4: #{tpu_custom_call.1} parent=1 // pred_region
      %s11 = ssub.s32 384, 384
      %12 = vsyncadd [#allocation3], %s11
      %s13 = sshll.u32 [#allocation2], 4
      %s14 = int_to_ptr.vmem [resolvable:$true] %s13
      %19 = dma.hbm_to_vmem [thread:$0]  %s0, 384, %s14, [#allocation3], 128, 128, 8
    $region5: #{tpu_custom_call.1} parent=1 // pred_fallthru
      _
    // Predicated region
    $region6: #{tpu_custom_call.1} parent=1 // pred_check
      _
    $region7: #{tpu_custom_call.1} parent=1 // pred_check_branch
      %21 = sbr.rel (0) target = $region9
    $region8: #{tpu_custom_call.1} parent=1 // pred_region
      %22 = dma.done [#allocation3], 384
    $region9: #{tpu_custom_call.1} parent=1 // pred_fallthru
      _
    %v23 = vld [vmem:[#allocation2] sm:$0xff]
    %s24 = scalar_lea.vmem [#allocation2], 8
    %v25 = vld [vmem:[%s24] sm:$0xff]
    %s26 = scalar_lea.vmem [#allocation2], 16
    %v27 = vld [vmem:[%s26] sm:$0xff]
    %v28 = vmul.f32 %v23, %v23
    %v29 = vmul.f32 %v25, %v25
    %v30 = vadd.f32 %v28, %v29
    %v31 = vmul.f32 %v27, %v27
    %v32 = vadd.f32 %v30, %v31
    %v33 = vrsqrt.pop %v32
    %v34 = vsub.f32 0.0, %v23
    %v35 = vmul.f32 %v34, %v33
    %v36 = vsub.f32 0.0, %v25
    %v37 = vmul.f32 %v36, %v33
    %v38 = vsub.f32 0.0, %v27
    %v39 = vmul.f32 %v38, %v33
    %vm40 = vcmp.eq.f32.partialorder %v23, 0.0
    %vm41 = vcmp.eq.f32.partialorder %v25, 0.0
    %vm42 = vmand %vm40, %vm41
    %v43 = vsub.f32 0.0, %v37
    %v44 = vsel %vm42, -1.0, %v43
    %v45 = vsel %vm42, 0.0, %v35
    %v46 = vmul.f32 %v44, %v44
    %v47 = vmul.f32 %v45, %v45
    %v48 = vadd.f32 %v46, %v47
    %v49 = vrsqrt.pop %v48
    %v50 = vmul.f32 %v44, %v49
    %v51 = vmul.f32 %v45, %v49
    %v52 = vmul.f32 %v51, %v39
    %v53 = vsub.f32 0.0, %v50
    %v54 = vmul.f32 %v53, %v39
    %v55 = vmul.f32 %v50, %v37
    %v56 = vmul.f32 %v51, %v35
    %v57 = vsub.f32 %v55, %v56
    %58 = vst [vmem:[#allocation5] sm:$0xff] %v52
    %s59 = scalar_lea.vmem [#allocation5], 8
    %60 = vst [vmem:[%s59] sm:$0xff] %v50
    %s61 = scalar_lea.vmem [#allocation5], 16
    %62 = vst [vmem:[%s61] sm:$0xff] %v35
    %s63 = scalar_lea.vmem [#allocation5], 24
    %64 = vst [vmem:[%s63] sm:$0xff] %v23
    %s65 = scalar_lea.vmem [#allocation5], 32
    %66 = vst [vmem:[%s65] sm:$0xff] %v54
    %s67 = scalar_lea.vmem [#allocation5], 40
    %68 = vst [vmem:[%s67] sm:$0xff] %v51
    %s69 = scalar_lea.vmem [#allocation5], 48
    %70 = vst [vmem:[%s69] sm:$0xff] %v37
    %s71 = scalar_lea.vmem [#allocation5], 56
    %72 = vst [vmem:[%s71] sm:$0xff] %v25
    %s73 = scalar_lea.vmem [#allocation5], 64
    %74 = vst [vmem:[%s73] sm:$0xff] %v57
    %s75 = scalar_lea.vmem [#allocation5], 72
    %76 = vst [vmem:[%s75] sm:$0xff] 0.0
    %s77 = scalar_lea.vmem [#allocation5], 80
    %78 = vst [vmem:[%s77] sm:$0xff] %v39
    %s79 = scalar_lea.vmem [#allocation5], 88
    %80 = vst [vmem:[%s79] sm:$0xff] %v27
    // Predicated region
    $region10: #{tpu_custom_call.1} parent=1 // pred_check
      _
    $region11: #{tpu_custom_call.1} parent=1 // pred_check_branch
      %82 = sbr.rel (0) target = $region13
    $region12: #{tpu_custom_call.1} parent=1 // pred_region
      %s84 = ssub.s32 1536, 1536
      %85 = vsyncadd [#allocation4], %s84
      %s86 = sshll.u32 [#allocation5], 4
      %s87 = int_to_ptr.vmem [resolvable:$true] %s86
      %92 = dma.vmem_to_hbm [thread:$0]  %s87, 1536, %s1, [#allocation4], 128, 128, 8
    $region13: #{tpu_custom_call.1} parent=1 // pred_fallthru
      _
    // Predicated region
    $region14: #{tpu_custom_call.1} parent=1 // pred_check
      _
    $region15: #{tpu_custom_call.1} parent=1 // pred_check_branch
      %94 = sbr.rel (0) target = $region17
    $region16: #{tpu_custom_call.1} parent=1 // pred_region
      %95 = dma.done [#allocation4], 1536
    $region17: #{tpu_custom_call.1} parent=1 // pred_fallthru
      _
    %96 = vsyncpa [#allocation3], 1
    %97 = vsyncpa [#allocation4], 1

</llo_original>
